<compile_context>
chip_gen: v6e
topology: v6e:2x2x1
jax: 0.10.0
libtpu: 0.0.40
codegen_flags: <defaults>
</compile_context>

<pallas_src>
import jax
import jax.numpy as jnp
from jax import lax
from jax.experimental import pallas as pl
from jax.experimental.pallas import tpu as pltpu


def _swiglu_kernel(x_ref, wv_ref, w2t_ref, o_ref, acc_ref):
    # x_ref  : (tm, d_model)      current row-tile of the input
    # wv_ref : (2*tf, d_model)    fused [W chunk ; V chunk] (contiguous slab)
    # w2t_ref: (tf, d_model)      row chunk of W_2^T
    # o_ref  : (tm, d_model)      output row-tile (written at last k)
    # acc_ref: (tm, d_model)      f32 VMEM accumulator
    k = pl.program_id(1)

    @pl.when(k == 0)
    def _init():
        acc_ref[...] = jnp.zeros_like(acc_ref)

    x = x_ref[...]                       # native dtype (bf16 path stays bf16)
    wv = wv_ref[...]
    tf = wv_ref.shape[0] // 2            # static

    # Single fused up-projection, contracting d_model: (tm, d_model) x
    # (2*tf, d_model)^T -> (tm, 2*tf), f32 accumulation on the MXU.
    dn = (((1,), (1,)), ((), ()))
    ab = lax.dot_general(x, wv, dn, preferred_element_type=jnp.float32)
    a = ab[:, :tf]                       # W(x) chunk
    b = ab[:, tf:]                       # V(x) chunk

    # SiLU(a) * b in f32 (sigmoid on the EUP), back to MXU dtype for the
    # down-projection.
    h = (a * jax.nn.sigmoid(a) * b).astype(w2t_ref.dtype)        # (tm, tf)

    # Partial down-projection over this d_ff chunk (standard contraction,
    # contiguous W_2^T rows): (tm, tf) @ (tf, d_model) -> (tm, d_model).
    acc_ref[...] += jnp.dot(h, w2t_ref[...], preferred_element_type=jnp.float32)

    @pl.when(k == pl.num_programs(1) - 1)
    def _store():
        o_ref[...] = acc_ref[...].astype(o_ref.dtype)


def _round_up(n, m):
    return ((n + m - 1) // m) * m


def _choose_tile(extent, target, granule):
    """Pick a tile size (multiple of `granule`, <= target) and a padded extent
    it divides.  Prefers the largest exact divisor that is not much smaller
    than the target; otherwise pads the extent (zero rows are inert here)."""
    target = max(granule, _round_up(min(target, extent), granule))
    for cand in range(target, granule - 1, -granule):
        if extent % cand == 0:
            if 2 * cand >= target:
                return cand, extent
            break
    return target, _round_up(extent, target)


def _default_config():
    """Generation-aware (tm, tf, vmem_limit_bytes) derived from VMEM capacity."""
    vmem_bytes = 128 * 1024 * 1024
    try:
        info = pltpu.get_tpu_info()
        vmem_bytes = int(getattr(info, "vmem_capacity_bytes", vmem_bytes))
    except Exception:
        pass
    vmem_limit = int(vmem_bytes * 7 // 8)        # ~12.5% headroom for Mosaic scratch
    if vmem_bytes >= 100 * 1024 * 1024:
        # v5e / v6e (128 MiB VMEM): big tiles, few k-steps.
        return 512, 1024, vmem_limit
    # v7x (64 MiB VMEM): keep weight chunks small, rows large (HBM roofline).
    return 512, 256, vmem_limit


def swiglu_feedforward(x, W, V, W2, *, tm=None, tf=None, vmem_limit_bytes=None):
    """x: (batch, seq, d_model). W, V: (d_ff, d_model). W2: (d_model, d_ff)."""
    batch, seq, d_model = x.shape
    d_ff = W.shape[0]
    assert W.shape == (d_ff, d_model)
    assert V.shape == (d_ff, d_model)
    assert W2.shape == (d_model, d_ff)

    tm_d, tf_d, vmem_d = _default_config()
    tm = tm_d if tm is None else tm
    tf = tf_d if tf is None else tf
    vmem_limit_bytes = vmem_d if vmem_limit_bytes is None else vmem_limit_bytes

    M = batch * seq
    tm, M_pad = _choose_tile(M, tm, 8)          # rows: sublane-aligned tiles
    tf, d_ff_pad = _choose_tile(d_ff, tf, 128)  # d_ff: lane-aligned tiles

    x2d = x.reshape(M, d_model)
    if M_pad != M:
        x2d = jnp.pad(x2d, ((0, M_pad - M), (0, 0)))

    # One-time layout plumbing (in real use, pre-fuse/pre-transpose the weights
    # once at load time instead of per call):
    W2t = W2.T                                   # (d_ff, d_model), contiguous rows
    if d_ff_pad != d_ff:
        pad = ((0, d_ff_pad - d_ff), (0, 0))
        Wp, Vp, W2t = jnp.pad(W, pad), jnp.pad(V, pad), jnp.pad(W2t, pad)
    else:
        Wp, Vp = W, V

    nk = d_ff_pad // tf
    # Fused gate+up weights: chunk k of WV is the contiguous slab
    # [W rows k*tf:(k+1)*tf ; V rows k*tf:(k+1)*tf] of shape (2*tf, d_model).
    WV = jnp.concatenate(
        [Wp.reshape(nk, tf, d_model), Vp.reshape(nk, tf, d_model)], axis=1
    ).reshape(2 * d_ff_pad, d_model)

    n_row = M_pad // tm
    itemsize = jnp.dtype(x.dtype).itemsize
    w_item = jnp.dtype(W.dtype).itemsize
    cost = pl.CostEstimate(
        flops=6 * M_pad * d_model * d_ff_pad,
        transcendentals=M_pad * d_ff_pad,
        bytes_accessed=(2 * M_pad * d_model * itemsize
                        + n_row * 3 * d_ff_pad * d_model * w_item),
    )

    out2d = pl.pallas_call(
        _swiglu_kernel,
        out_shape=jax.ShapeDtypeStruct((M_pad, d_model), x.dtype),
        grid_spec=pltpu.PrefetchScalarGridSpec(
            num_scalar_prefetch=0,
            grid=(n_row, nk),                               # reduction axis last
            in_specs=[
                pl.BlockSpec((tm, d_model), lambda i, k: (i, 0)),       # x rows
                pl.BlockSpec((2 * tf, d_model), lambda i, k: (k, 0)),   # [W;V] slab
                pl.BlockSpec((tf, d_model), lambda i, k: (k, 0)),       # W2^T rows
            ],
            out_specs=pl.BlockSpec((tm, d_model), lambda i, k: (i, 0)),
            scratch_shapes=[pltpu.VMEM((tm, d_model), jnp.float32)],
        ),
        compiler_params=pltpu.CompilerParams(
            dimension_semantics=("parallel", "arbitrary"),
            vmem_limit_bytes=vmem_limit_bytes,
        ),
        cost_estimate=cost,
    )(x2d, WV, W2t)

    return out2d[:M].reshape(batch, seq, d_model)


def _init_linear_weight(key, out_features, in_features, dtype=jnp.float32):
    # PyTorch-nn.Linear-like uniform(-1/sqrt(fan_in), 1/sqrt(fan_in)).
    bound = 1.0 / (in_features ** 0.5)
    return jax.random.uniform(key, (out_features, in_features),
                              minval=-bound, maxval=bound, dtype=dtype)


if __name__ == "__main__":
    batch, seq, d_model, d_ff = 2, 8, 32, 64
    key = jax.random.PRNGKey(0)
    kx, kw, kv, kw2 = jax.random.split(key, 4)

    x = jax.random.normal(kx, (batch, seq, d_model), dtype=jnp.float32)
    W = _init_linear_weight(kw, d_ff, d_model)     # nn.Linear(d_model, d_ff)
    V = _init_linear_weight(kv, d_ff, d_model)     # nn.Linear(d_model, d_ff)
    W2 = _init_linear_weight(kw2, d_model, d_ff)   # nn.Linear(d_ff, d_model)

    out = swiglu_feedforward(x, W, V, W2)
    out = jax.block_until_ready(out)

    # Pure-JAX reference of the SwiGLU semantics (dropout p=0 -> identity).
    a = x @ W.T
    ref = (a * jax.nn.sigmoid(a) * (x @ V.T)) @ W2.T
    assert out.shape == x.shape
    assert jnp.allclose(out, ref, atol=1e-4, rtol=1e-4)

    print("KERNEL_OK")
</pallas_src>

<mosaic_0001>
module attributes {stable_mosaic.version = 11 : i64} {
  func.func @_swiglu_kernel(%arg0: i32, %arg1: i32, %arg2: memref<16x32xf32, #tpu.memory_space<vmem>>, %arg3: memref<256x32xf32, #tpu.memory_space<vmem>>, %arg4: memref<128x32xf32, #tpu.memory_space<vmem>>, %arg5: memref<16x32xf32, #tpu.memory_space<vmem>>, %arg6: memref<16x32xf32, #tpu.memory_space<vmem>>) attributes {dimension_semantics = [#tpu.dimension_semantics<parallel>, #tpu.dimension_semantics<arbitrary>], iteration_bounds = array<i64: 1, 1>, scalar_prefetch = 0 : i64, scratch_operands = 1 : i64, tpu.core_type = #tpu.core_type<tc>, window_params = [{transform_indices = @transform_0, window_bounds = array<i64: 16, 32>}, {transform_indices = @transform_1, window_bounds = array<i64: 256, 32>}, {transform_indices = @transform_2, window_bounds = array<i64: 128, 32>}, {transform_indices = @transform_3, window_bounds = array<i64: 16, 32>}]} {
    %c0_i32 = arith.constant 0 : i32
    %0 = arith.cmpi eq, %arg1, %c0_i32 : i32
    %1 = arith.extui %0 : i1 to i32
    %c0_i32_0 = arith.constant 0 : i32
    %2 = arith.cmpi ne, %1, %c0_i32_0 : i32
    scf.if %2 {
      %cst_14 = arith.constant 0.000000e+00 : f32
      %23 = vector.broadcast %cst_14 : f32 to vector<16x32xf32>
      %c0_15 = arith.constant 0 : index
      %c0_16 = arith.constant 0 : index
      %24 = vector.load %arg6[%c0_15, %c0_16] : memref<16x32xf32, #tpu.memory_space<vmem>>, vector<16x32xf32>
      tpu.vector_store %arg6[%c0_15, %c0_16], %23 {strides = array<i32>} : memref<16x32xf32, #tpu.memory_space<vmem>>, vector<16x32xf32>,
    } else {
    }
    %c0 = arith.constant 0 : index
    %c0_1 = arith.constant 0 : index
    %3 = vector.load %arg2[%c0, %c0_1] : memref<16x32xf32, #tpu.memory_space<vmem>>, vector<16x32xf32>
    %c0_2 = arith.constant 0 : index
    %c0_3 = arith.constant 0 : index
    %4 = vector.load %arg3[%c0_2, %c0_3] : memref<256x32xf32, #tpu.memory_space<vmem>>, vector<256x32xf32>
    %cst = arith.constant dense<0.000000e+00> : vector<16x256xf32>
    %5 = tpu.matmul %3, %4, %cst {dimension_numbers = #tpu.dot_dimension_numbers<[1], [1], [0], [0], [0, 0, 1, 0], [], []>} : vector<16x32xf32>, vector<256x32xf32>, vector<16x256xf32> -> vector<16x256xf32>
    %6 = vector.extract_strided_slice %5 {offsets = [0, 0], sizes = [16, 128], strides = [1, 1]} : vector<16x256xf32> to vector<16x128xf32>
    %7 = vector.extract_strided_slice %5 {offsets = [0, 128], sizes = [16, 128], strides = [1, 1]} : vector<16x256xf32> to vector<16x128xf32>
    %8 = arith.negf %6 : vector<16x128xf32>
    %9 = math.exp %8 : vector<16x128xf32>
    %cst_4 = arith.constant 1.000000e+00 : f32
    %10 = vector.broadcast %cst_4 : f32 to vector<16x128xf32>
    %11 = arith.addf %10, %9 : vector<16x128xf32>
    %12 = arith.divf %10, %11 : vector<16x128xf32>
    %13 = arith.mulf %6, %12 : vector<16x128xf32>
    %14 = arith.mulf %13, %7 : vector<16x128xf32>
    %c0_5 = arith.constant 0 : index
    %c0_6 = arith.constant 0 : index
    %15 = vector.load %arg6[%c0_5, %c0_6] : memref<16x32xf32, #tpu.memory_space<vmem>>, vector<16x32xf32>
    %c0_7 = arith.constant 0 : index
    %c0_8 = arith.constant 0 : index
    %16 = vector.load %arg4[%c0_7, %c0_8] : memref<128x32xf32, #tpu.memory_space<vmem>>, vector<128x32xf32>
    %cst_9 = arith.constant dense<0.000000e+00> : vector<16x32xf32>
    %17 = tpu.matmul %14, %16, %cst_9 {dimension_numbers = #tpu.dot_dimension_numbers<[1], [0], [0], [1], [0, 0, 1, 1], [], []>} : vector<16x128xf32>, vector<128x32xf32>, vector<16x32xf32> -> vector<16x32xf32>
    %18 = arith.addf %15, %17 : vector<16x32xf32>
    %c0_10 = arith.constant 0 : index
    %c0_11 = arith.constant 0 : index
    %19 = vector.load %arg6[%c0_10, %c0_11] : memref<16x32xf32, #tpu.memory_space<vmem>>, vector<16x32xf32>
    tpu.vector_store %arg6[%c0_10, %c0_11], %18 {strides = array<i32>} : memref<16x32xf32, #tpu.memory_space<vmem>>, vector<16x32xf32>,
    %c0_i32_12 = arith.constant 0 : i32
    %20 = arith.cmpi eq, %arg1, %c0_i32_12 : i32
    %21 = arith.extui %20 : i1 to i32
    %c0_i32_13 = arith.constant 0 : i32
    %22 = arith.cmpi ne, %21, %c0_i32_13 : i32
    scf.if %22 {
      %c0_14 = arith.constant 0 : index
      %c0_15 = arith.constant 0 : index
      %23 = vector.load %arg6[%c0_14, %c0_15] : memref<16x32xf32, #tpu.memory_space<vmem>>, vector<16x32xf32>
      %c0_16 = arith.constant 0 : index
      %c0_17 = arith.constant 0 : index
      %24 = vector.load %arg5[%c0_16, %c0_17] : memref<16x32xf32, #tpu.memory_space<vmem>>, vector<16x32xf32>
      tpu.vector_store %arg5[%c0_16, %c0_17], %23 {strides = array<i32>} : memref<16x32xf32, #tpu.memory_space<vmem>>, vector<16x32xf32>,
    } else {
    }
    return
  }
  func.func @transform_0(%arg0: i32, %arg1: i32) -> (i32, i32) {
    %c0_i32 = arith.constant 0 : i32
    %c0_i32_0 = arith.constant 0 : i32
    return %arg0, %c0_i32 : i32, i32
  }
  func.func @transform_1(%arg0: i32, %arg1: i32) -> (i32, i32) {
    %c0_i32 = arith.constant 0 : i32
    %c0_i32_0 = arith.constant 0 : i32
    return %arg1, %c0_i32 : i32, i32
  }
  func.func @transform_2(%arg0: i32, %arg1: i32) -> (i32, i32) {
    %c0_i32 = arith.constant 0 : i32
    %c0_i32_0 = arith.constant 0 : i32
    return %arg1, %c0_i32 : i32, i32
  }
  func.func @transform_3(%arg0: i32, %arg1: i32) -> (i32, i32) {
    %c0_i32 = arith.constant 0 : i32
    %c0_i32_0 = arith.constant 0 : i32
    return %arg0, %c0_i32 : i32, i32
  }
}

</mosaic_0001>

<llo_original>
// kernel: tpu_custom_call.1
$region0: #{tpu_custom_call.1}
  #allocation0 [shape = 'u32[]', space=smem, size = 0x4, offset = 0x4, fixed_abs, tag = 'smem constant byte address 0x4 - core index']
  #allocation1 [shape = 'u32[144,128]{1,0:T(1,128)}', space=vmem, size = 0x12000, scoped, tag = 'internal scratch']
  #allocation2 [shape = 'f32[16,32]{1,0:T(8,128)}', space=vmem, size = 0x2000, scoped, tag = 'scratch operand']
  %s0 = inlined_call_operand.vmem [shape: f32[16,32], index: 0, kind: input, shape index: {}]
  %s1 = inlined_call_operand.vmem [shape: f32[256,32], index: 1, kind: input, shape index: {}]
  %s2 = inlined_call_operand.vmem [shape: f32[128,32], index: 2, kind: input, shape index: {}]
  %s3 = inlined_call_operand.hbm [shape: f32[16,32], index: 3, kind: output, shape index: {}]
  %s4 = sld [smem:[#allocation0]]
  $region30: #{tpu_custom_call.1} parent=0
    _
  %s6 = ssub.s32 1, %s4
  %s7 = scalar_select 0, %s6, %s4
  $region1: #{tpu_custom_call.1} parent=0
    #allocation3 [shape = 'u8[8192]{0}', space=vmem, size = 0x2000, scoped, tag = 'output window, operand 0, single buffered']
    #allocation4 [shape = 's32[1]{0}', space=sflag, size = 0x4, scoped, tag = 'scoped memory for tpu_custom_call.1']
    %8 = vsyncpa [#allocation4], 0
    // Predicated region
    $region2: #{tpu_custom_call.1} parent=1 // pred_check
      _
    $region3: #{tpu_custom_call.1} parent=1 // pred_check_branch
      %10 = sbr.rel (0) target = $region5
    $region4: #{tpu_custom_call.1} parent=1 // pred_region
      _
    $region5: #{tpu_custom_call.1} parent=1 // pred_fallthru
      _
    // Predicated region
    $region6: #{tpu_custom_call.1} parent=1 // pred_check
      _
    $region7: #{tpu_custom_call.1} parent=1 // pred_check_branch
      %12 = sbr.rel (0) target = $region9
    $region8: #{tpu_custom_call.1} parent=1 // pred_region
      _
    $region9: #{tpu_custom_call.1} parent=1 // pred_fallthru
      _
    // Predicated region
    $region10: #{tpu_custom_call.1} parent=1 // pred_check
      _
    $region11: #{tpu_custom_call.1} parent=1 // pred_check_branch
      %14 = sbr.rel (0) target = $region13
    $region12: #{tpu_custom_call.1} parent=1 // pred_region
      _
    $region13: #{tpu_custom_call.1} parent=1 // pred_fallthru
      _
    %p15 = scmp.eq.s32.totalorder 0, 0
    // Predicated region
    $region14: #{tpu_custom_call.1} parent=1 // pred_check
      %p16 = pneg %p15
    $region15: #{tpu_custom_call.1} parent=1 // pred_check_branch
      %18 = sbr.rel (%p16) target = $region17
    $region16: #{tpu_custom_call.1} parent=1 // pred_region
      %vm19 = vcmask 261120
      %20 = vst.msk [vmem:[#allocation2] sm:$0xff] %vm19, 0.0
      %21 = vst.msk [vmem:[#allocation2 + $0x8] sm:$0xff] %vm19, 0.0
    $region17: #{tpu_custom_call.1} parent=1 // pred_fallthru
      _
    %v22 = vld [vmem:[%s0] sm:$0xff]
    %v23 = vld [vmem:[%s0 + $0x8] sm:$0xff]
    %v24 = vld [vmem:[%s1] sm:$0xff]
    %v25 = vld [vmem:[%s1 + $0x8] sm:$0xff]
    %v26 = vld [vmem:[%s1 + $0x10] sm:$0xff]
    %v27 = vld [vmem:[%s1 + $0x18] sm:$0xff]
    %v28 = vld [vmem:[%s1 + $0x20] sm:$0xff]
    %v29 = vld [vmem:[%s1 + $0x28] sm:$0xff]
    %v30 = vld [vmem:[%s1 + $0x30] sm:$0xff]
    %v31 = vld [vmem:[%s1 + $0x38] sm:$0xff]
    %v32 = vld [vmem:[%s1 + $0x40] sm:$0xff]
    %v33 = vld [vmem:[%s1 + $0x48] sm:$0xff]
    %v34 = vld [vmem:[%s1 + $0x50] sm:$0xff]
    %v35 = vld [vmem:[%s1 + $0x58] sm:$0xff]
    %v36 = vld [vmem:[%s1 + $0x60] sm:$0xff]
    %v37 = vld [vmem:[%s1 + $0x68] sm:$0xff]
    %v38 = vld [vmem:[%s1 + $0x70] sm:$0xff]
    %v39 = vld [vmem:[%s1 + $0x78] sm:$0xff]
    %v40 = vld [vmem:[%s1 + $0x80] sm:$0xff]
    %v41 = vld [vmem:[%s1 + $0x88] sm:$0xff]
    %v42 = vld [vmem:[%s1 + $0x90] sm:$0xff]
    %v43 = vld [vmem:[%s1 + $0x98] sm:$0xff]
    %v44 = vld [vmem:[%s1 + $0xa0] sm:$0xff]
    %v45 = vld [vmem:[%s1 + $0xa8] sm:$0xff]
    %v46 = vld [vmem:[%s1 + $0xb0] sm:$0xff]
    %v47 = vld [vmem:[%s1 + $0xb8] sm:$0xff]
    %v48 = vld [vmem:[%s1 + $0xc0] sm:$0xff]
    %v49 = vld [vmem:[%s1 + $0xc8] sm:$0xff]
    %v50 = vld [vmem:[%s1 + $0xd0] sm:$0xff]
    %v51 = vld [vmem:[%s1 + $0xd8] sm:$0xff]
    %v52 = vld [vmem:[%s1 + $0xe0] sm:$0xff]
    %v53 = vld [vmem:[%s1 + $0xe8] sm:$0xff]
    %v54 = vld [vmem:[%s1 + $0xf0] sm:$0xff]
    %v55 = vld [vmem:[%s1 + $0xf8] sm:$0xff]
    %vm56 = vcmask 261120
    %v58 = vsel %vm56, %v22, 0
    %v61 = vsel %vm56, %v23, 0
    %v64 = vsel %vm56, %v24, 0
    %v67 = vsel %vm56, %v25, 0
    %v70 = vsel %vm56, %v26, 0
    %v73 = vsel %vm56, %v27, 0
    %v76 = vsel %vm56, %v28, 0
    %v79 = vsel %vm56, %v29, 0
    %v82 = vsel %vm56, %v30, 0
    %v85 = vsel %vm56, %v31, 0
    %v88 = vsel %vm56, %v32, 0
    %v91 = vsel %vm56, %v33, 0
    %v94 = vsel %vm56, %v34, 0
    %v97 = vsel %vm56, %v35, 0
    %v100 = vsel %vm56, %v36, 0
    %v103 = vsel %vm56, %v37, 0
    %v106 = vsel %vm56, %v38, 0
    %v109 = vsel %vm56, %v39, 0
    %v112 = vsel %vm56, %v40, 0
    %v115 = vsel %vm56, %v41, 0
    %v118 = vsel %vm56, %v42, 0
    %v121 = vsel %vm56, %v43, 0
    %v124 = vsel %vm56, %v44, 0
    %v127 = vsel %vm56, %v45, 0
    %v130 = vsel %vm56, %v46, 0
    %v133 = vsel %vm56, %v47, 0
    %v136 = vsel %vm56, %v48, 0
    %v139 = vsel %vm56, %v49, 0
    %v142 = vsel %vm56, %v50, 0
    %v145 = vsel %vm56, %v51, 0
    %v148 = vsel %vm56, %v52, 0
    %v151 = vsel %vm56, %v53, 0
    %v154 = vsel %vm56, %v54, 0
    %v157 = vsel %vm56, %v55, 0
    %159 = vmatprep.subr.mxu0 0.0
    %160 = vmatpush1.xpose.msra.mxu0 %v109
    %161 = vmatprep.subr.mxu0 0.0
    %162 = vmatpush1.xpose.msra.mxu0 %v106
    %163 = vmatprep.subr.mxu0 0.0
    %164 = vmatpush1.xpose.msra.mxu0 %v103
    %165 = vmatprep.subr.mxu0 0.0
    %166 = vmatpush1.xpose.msra.mxu0 %v100
    %167 = vmatprep.subr.mxu0 0.0
    %168 = vmatpush1.xpose.msra.mxu0 %v97
    %169 = vmatprep.subr.mxu0 0.0
    %170 = vmatpush1.xpose.msra.mxu0 %v94
    %171 = vmatprep.subr.mxu0 0.0
    %172 = vmatpush1.xpose.msra.mxu0 %v91
    %173 = vmatprep.subr.mxu0 0.0
    %174 = vmatpush1.xpose.msra.mxu0 %v88
    %175 = vmatprep.subr.mxu0 0.0
    %176 = vmatpush1.xpose.msra.mxu0 %v85
    %177 = vmatprep.subr.mxu0 0.0
    %178 = vmatpush1.xpose.msra.mxu0 %v82
    %179 = vmatprep.subr.mxu0 0.0
    %180 = vmatpush1.xpose.msra.mxu0 %v79
    %181 = vmatprep.subr.mxu0 0.0
    %182 = vmatpush1.xpose.msra.mxu0 %v76
    %183 = vmatprep.subr.mxu0 0.0
    %184 = vmatpush1.xpose.msra.mxu0 %v73
    %185 = vmatprep.subr.mxu0 0.0
    %186 = vmatpush1.xpose.msra.mxu0 %v70
    %187 = vmatprep.subr.mxu0 0.0
    %188 = vmatpush1.xpose.msra.mxu0 %v67
    %189 = vmatprep.subr.mxu0 0.0
    %190 = vmatpush1.xpose.msra.mxu0 %v64
    %191 = vmatprep.subr.mxu0 0.0
    %192 = vmatpush2.xpose.msra.mxu0 %v157
    %193 = vmatprep.subr.mxu0 0.0
    %194 = vmatpush2.xpose.msra.mxu0 %v154
    %195 = vmatprep.subr.mxu0 0.0
    %196 = vmatpush2.xpose.msra.mxu0 %v151
    %197 = vmatprep.subr.mxu0 0.0
    %198 = vmatpush2.xpose.msra.mxu0 %v148
    %199 = vmatprep.subr.mxu0 0.0
    %200 = vmatpush2.xpose.msra.mxu0 %v145
    %201 = vmatprep.subr.mxu0 0.0
    %202 = vmatpush2.xpose.msra.mxu0 %v142
    %203 = vmatprep.subr.mxu0 0.0
    %204 = vmatpush2.xpose.msra.mxu0 %v139
    %205 = vmatprep.subr.mxu0 0.0
    %206 = vmatpush2.xpose.msra.mxu0 %v136
    %207 = vmatprep.subr.mxu0 0.0
    %208 = vmatpush2.xpose.msra.mxu0 %v133
    %209 = vmatprep.subr.mxu0 0.0
    %210 = vmatpush2.xpose.msra.mxu0 %v130
    %211 = vmatprep.subr.mxu0 0.0
    %212 = vmatpush2.xpose.msra.mxu0 %v127
    %213 = vmatprep.subr.mxu0 0.0
    %214 = vmatpush2.xpose.msra.mxu0 %v124
    %215 = vmatprep.subr.mxu0 0.0
    %216 = vmatpush2.xpose.msra.mxu0 %v121
    %217 = vmatprep.subr.mxu0 0.0
    %218 = vmatpush2.xpose.msra.mxu0 %v118
    %219 = vmatprep.subr.mxu0 0.0
    %220 = vmatpush2.xpose.msra.mxu0 %v115
    %221 = vmatprep.subr.mxu0 0.0
    %222 = vmatpush2.xpose.msra.mxu0 %v112
    %223 = vmatprep.mubr.f32.mxu0 0.0
    %224 = vmatmul.mubr.f32.gmra.mxu0 %v58
    %v225 = vpop.f32.mrf.mxu0
    %v226 = vadd.f32 0.0, %v225
    %v227 = vpop.f32.mrf.mxu0
    %v228 = vadd.f32 0.0, %v227
    %229 = vmatprep.mubr.f32.mxu0 0.0
    %230 = vmatmul.mubr.f32.gmra.mxu0 %v61
    %v231 = vpop.f32.mrf.mxu0
    %v232 = vadd.f32 0.0, %v231
    %v233 = vpop.f32.mrf.mxu0
    %v234 = vadd.f32 0.0, %v233
    %235 = vdwg.mxu0
    %v236 = vxor.u32 %v226, 2147483648
    %v237 = vxor.u32 %v232, 2147483648
    %v238 = vmul.f32 %v236, 1.442695
    %v239 = vpow.pop %v238
    %v240 = vmul.f32 %v237, 1.442695
    %v241 = vpow.pop %v240
    %v242 = vadd.f32 %v239, 1.0
    %v243 = vadd.f32 %v241, 1.0
    %v244 = vrcp.pop %v242
    %v245 = vmul.f32 1.0, %v244
    %v246 = vrcp.pop %v243
    %v247 = vmul.f32 1.0, %v246
    %v248 = vmul.f32 %v226, %v245
    %v249 = vmul.f32 %v232, %v247
    %v250 = vmul.f32 %v248, %v228
    %v251 = vmul.f32 %v249, %v234
    %v252 = vld [vmem:[#allocation2] sm:$0xff]
    %v253 = vld [vmem:[#allocation2 + $0x8] sm:$0xff]
    %v254 = vld [vmem:[%s2] sm:$0xff]
    %v255 = vld [vmem:[%s2 + $0x8] sm:$0xff]
    %v256 = vld [vmem:[%s2 + $0x10] sm:$0xff]
    %v257 = vld [vmem:[%s2 + $0x18] sm:$0xff]
    %v258 = vld [vmem:[%s2 + $0x20] sm:$0xff]
    %v259 = vld [vmem:[%s2 + $0x28] sm:$0xff]
    %v260 = vld [vmem:[%s2 + $0x30] sm:$0xff]
    %v261 = vld [vmem:[%s2 + $0x38] sm:$0xff]
    %v262 = vld [vmem:[%s2 + $0x40] sm:$0xff]
    %v263 = vld [vmem:[%s2 + $0x48] sm:$0xff]
    %v264 = vld [vmem:[%s2 + $0x50] sm:$0xff]
    %v265 = vld [vmem:[%s2 + $0x58] sm:$0xff]
    %v266 = vld [vmem:[%s2 + $0x60] sm:$0xff]
    %v267 = vld [vmem:[%s2 + $0x68] sm:$0xff]
    %v268 = vld [vmem:[%s2 + $0x70] sm:$0xff]
    %v269 = vld [vmem:[%s2 + $0x78] sm:$0xff]
    %270 = vmatprep.subr.mxu0 0.0
    %271 = vmatpush1.msra.mxu0 %v269
    %272 = vmatprep.subr.mxu0 0.0
    %273 = vmatpush1.msra.mxu0 %v268
    %274 = vmatprep.subr.mxu0 0.0
    %275 = vmatpush1.msra.mxu0 %v267
    %276 = vmatprep.subr.mxu0 0.0
    %277 = vmatpush1.msra.mxu0 %v266
    %278 = vmatprep.subr.mxu0 0.0
    %279 = vmatpush1.msra.mxu0 %v265
    %280 = vmatprep.subr.mxu0 0.0
    %281 = vmatpush1.msra.mxu0 %v264
    %282 = vmatprep.subr.mxu0 0.0
    %283 = vmatpush1.msra.mxu0 %v263
    %284 = vmatprep.subr.mxu0 0.0
    %285 = vmatpush1.msra.mxu0 %v262
    %286 = vmatprep.subr.mxu0 0.0
    %287 = vmatpush1.msra.mxu0 %v261
    %288 = vmatprep.subr.mxu0 0.0
    %289 = vmatpush1.msra.mxu0 %v260
    %290 = vmatprep.subr.mxu0 0.0
    %291 = vmatpush1.msra.mxu0 %v259
    %292 = vmatprep.subr.mxu0 0.0
    %293 = vmatpush1.msra.mxu0 %v258
    %294 = vmatprep.subr.mxu0 0.0
    %295 = vmatpush1.msra.mxu0 %v257
    %296 = vmatprep.subr.mxu0 0.0
    %297 = vmatpush1.msra.mxu0 %v256
    %298 = vmatprep.subr.mxu0 0.0
    %299 = vmatpush1.msra.mxu0 %v255
    %300 = vmatprep.subr.mxu0 0.0
    %301 = vmatpush1.msra.mxu0 %v254
    %302 = vmatprep.subr.mxu0 0.0
    %303 = vmatpush2.msra.mxu0 0.0
    %304 = vmatprep.subr.mxu0 0.0
    %305 = vmatpush2.msra.mxu0 0.0
    %306 = vmatprep.subr.mxu0 0.0
    %307 = vmatpush2.msra.mxu0 0.0
    %308 = vmatprep.subr.mxu0 0.0
    %309 = vmatpush2.msra.mxu0 0.0
    %310 = vmatprep.subr.mxu0 0.0
    %311 = vmatpush2.msra.mxu0 0.0
    %312 = vmatprep.subr.mxu0 0.0
    %313 = vmatpush2.msra.mxu0 0.0
    %314 = vmatprep.subr.mxu0 0.0
    %315 = vmatpush2.msra.mxu0 0.0
    %316 = vmatprep.subr.mxu0 0.0
    %317 = vmatpush2.msra.mxu0 0.0
    %318 = vmatprep.subr.mxu0 0.0
    %319 = vmatpush2.msra.mxu0 0.0
    %320 = vmatprep.subr.mxu0 0.0
    %321 = vmatpush2.msra.mxu0 0.0
    %322 = vmatprep.subr.mxu0 0.0
    %323 = vmatpush2.msra.mxu0 0.0
    %324 = vmatprep.subr.mxu0 0.0
    %325 = vmatpush2.msra.mxu0 0.0
    %326 = vmatprep.subr.mxu0 0.0
    %327 = vmatpush2.msra.mxu0 0.0
    %328 = vmatprep.subr.mxu0 0.0
    %329 = vmatpush2.msra.mxu0 0.0
    %330 = vmatprep.subr.mxu0 0.0
    %331 = vmatpush2.msra.mxu0 0.0
    %332 = vmatprep.subr.mxu0 0.0
    %333 = vmatpush2.msra.mxu0 0.0
    %334 = vmatprep.mubr.f32.mxu0 0.0
    %335 = vmatmul.mubr.f32.gmra.mxu0 %v250
    %v336 = vpop.f32.mrf.mxu0
    %v337 = vadd.f32 0.0, %v336
    %v338 = vpop.f32.mrf.mxu0
    %339 = vmatprep.mubr.f32.mxu0 0.0
    %340 = vmatmul.mubr.f32.gmra.mxu0 %v251
    %v341 = vpop.f32.mrf.mxu0
    %v342 = vadd.f32 0.0, %v341
    %v343 = vpop.f32.mrf.mxu0
    %344 = vdwg.mxu0
    %v345 = vadd.f32 %v252, %v337
    %v346 = vadd.f32 %v253, %v342
    %347 = vst.msk [vmem:[#allocation2] sm:$0xff] %vm56, %v345
    %348 = vst.msk [vmem:[#allocation2 + $0x8] sm:$0xff] %vm56, %v346
    // Predicated region
    $region18: #{tpu_custom_call.1} parent=1 // pred_check
      %p349 = pneg %p15
    $region19: #{tpu_custom_call.1} parent=1 // pred_check_branch
      %351 = sbr.rel (%p349) target = $region21
    $region20: #{tpu_custom_call.1} parent=1 // pred_region
      %v352 = vld [vmem:[#allocation2] sm:$0xff]
      %v353 = vld [vmem:[#allocation2 + $0x8] sm:$0xff]
      %354 = vst.msk [vmem:[#allocation3] sm:$0xff] %vm56, %v352
      %355 = vst.msk [vmem:[#allocation3 + $0x8] sm:$0xff] %vm56, %v353
    $region21: #{tpu_custom_call.1} parent=1 // pred_fallthru
      _
    // Predicated region
    $region22: #{tpu_custom_call.1} parent=1 // pred_check
      _
    $region23: #{tpu_custom_call.1} parent=1 // pred_check_branch
      %357 = sbr.rel (0) target = $region25
    $region24: #{tpu_custom_call.1} parent=1 // pred_region
      %s359 = ssub.s32 256, 256
      %360 = vsyncadd [#allocation4], %s359
      %s361 = sshll.u32 [#allocation3], 4
      %s362 = int_to_ptr.vmem [resolvable:$true] %s361
      %367 = dma.vmem_to_hbm [thread:$0]  %s362, 256, %s3, [#allocation4], 128, 128, 8
    $region25: #{tpu_custom_call.1} parent=1 // pred_fallthru
      _
    // Predicated region
    $region26: #{tpu_custom_call.1} parent=1 // pred_check
      _
    $region27: #{tpu_custom_call.1} parent=1 // pred_check_branch
      %369 = sbr.rel (0) target = $region29
    $region28: #{tpu_custom_call.1} parent=1 // pred_region
      %370 = dma.done [#allocation4], 256
    $region29: #{tpu_custom_call.1} parent=1 // pred_fallthru
      _
    %371 = vsyncpa [#allocation4], 1

</llo_original>
